<compile_context>
chip_gen: v6e
topology: v6e:2x2x1
jax: 0.10.0
libtpu: 0.0.40
codegen_flags: <defaults>
</compile_context>

<pallas_src>
import functools
import math

import jax
import jax.numpy as jnp
from jax import lax
from jax.experimental import pallas as pl
from jax.experimental.pallas import tpu as pltpu


def _round_up(a, b):
    return (a + b - 1) // b * b


# ---------------------------------------------------------------------------
# Pass 1: per-tile BatchNorm partial sums (stats only, no conv output).
# ---------------------------------------------------------------------------
def _stats_kernel(x_ref, w_ref, stats_ref):
    """x_ref: (tm, Kcp); w_ref: (Kcp, C4); stats_ref: (1, 2, C4) f32.

    Padded rows/channels are exact zeros (no bias), so they contribute 0 to
    both sums and no masking is needed.
    """
    acc = jnp.dot(x_ref[...], w_ref[...], preferred_element_type=jnp.float32)
    s1 = jnp.sum(acc, axis=0, keepdims=True)
    s2 = jnp.sum(acc * acc, axis=0, keepdims=True)
    stats_ref[...] = jnp.concatenate([s1, s2], axis=0).reshape(stats_ref.shape)


# ---------------------------------------------------------------------------
# Pass 2: recompute conv, apply BN scale/shift + ReLU, write the parity-
# interleaved output layout directly.
# ---------------------------------------------------------------------------
def _conv_bn_relu_kernel(x_ref, w_ref, scale_ref, shift_ref, out_ref, *, c_half):
    """x_ref: (t_nh, W, Kcp); w_ref: (Kcp, C4); scale/shift: (1, C4) f32;
    out_ref: (t_nh, 2, W, 2*Coutp) with c_half = 2*Coutp and C4 = 2*c_half.

    Lane layout of the matmul result per pixel: [ph0pw0 | ph0pw1 | ph1pw0 |
    ph1pw1], each Coutp wide, so the oh-parity slabs are contiguous lane
    halves of width 2*Coutp (a 128-multiple -> dense stores).
    """
    wmat = w_ref[...]
    t_nh, wdim, _ = x_ref.shape
    c4 = wmat.shape[1]
    # Hoist the broadcasts out of the loop (JAX does not CSE broadcast_in_dim).
    scale_b = jnp.broadcast_to(scale_ref[...], (wdim, c4))
    shift_b = jnp.broadcast_to(shift_ref[...], (wdim, c4))

    def body(i, carry):
        acc = jnp.dot(x_ref[i], wmat, preferred_element_type=jnp.float32)
        y = jnp.maximum(acc * scale_b + shift_b, 0.0)
        out_ref[i, 0, :, :] = y[:, :c_half].astype(out_ref.dtype)   # oh even
        out_ref[i, 1, :, :] = y[:, c_half:].astype(out_ref.dtype)   # oh odd
        return carry

    lax.fori_loop(0, t_nh, body, 0)


def upsampling_forward(x_nchw, w_t, bias, gamma, beta, *, eps=1e-5,
                       target_rows=2048, compute_dtype=jnp.bfloat16):
    """Equivalent of Upsampling(in_features, out_features).forward(x).

    x_nchw: (N, Cin, H, W) f32; w_t: (Cin, Cout, 3, 3) PyTorch ConvTranspose2d
    layout; bias/gamma/beta: (Cout,).  Returns (N, Cout, 2H, 2W) f32 (NCHW).

    Note: training-mode BatchNorm removes any per-channel constant added
    before it, so the ConvTranspose2d bias has no effect on the output and is
    intentionally never used (matches the PyTorch forward exactly).
    """
    del bias
    N, Cin, H, W = x_nchw.shape
    Cout = w_t.shape[1]
    OH, OW = 2 * H, 2 * W
    NH = N * H
    Kc = 4 * Cin                       # contraction: 4 shift slabs x Cin
    Kcp = _round_up(Kc, 16)            # sublane-aligned contraction
    Coutp = _round_up(Cout, 64)        # 2*Coutp is a 128-lane multiple
    C4 = 4 * Coutp                     # fused lane width of the matmul
    c_half = 2 * Coutp
    itemsize = jnp.dtype(compute_dtype).itemsize

    # ---- VMEM limit (generation-aware, safe fallback) -----------------------
    try:
        vmem_cap = int(pltpu.get_tpu_info().vmem_capacity_bytes)
    except Exception:
        vmem_cap = 64 * 1024 * 1024
    vmem_limit = max(32 * 1024 * 1024, min(vmem_cap * 3 // 4, 96 * 1024 * 1024))
    budget = int(vmem_limit * 0.7)

    # ---- Row-tile selection: t_nh full (n,h) rows of W pixels per step ------
    mult = 8 // math.gcd(W, 8)                       # makes t_nh*W % 8 == 0
    t_nh = max(1, min(NH, max(1, target_rows // W)))
    t_nh = max(mult, (t_nh // mult) * mult)
    if NH > mult:                                    # megacore: >= 2 row tiles
        t_nh = min(t_nh, _round_up(-(-NH // 2), mult))

    def _per_step_bytes(tnh):
        x_tile = tnh * W * Kcp * itemsize
        out_tile = tnh * 2 * W * c_half * 4
        w_bytes = Kcp * C4 * itemsize
        misc = 2 * C4 * 4 + 2 * W * C4 * 4
        return 2 * (x_tile + out_tile) + 2 * w_bytes + misc

    while t_nh > mult and _per_step_bytes(t_nh) > budget:
        t_nh = max(mult, (t_nh // 2 // mult) * mult)

    NHp = _round_up(NH, t_nh)
    grid_nh = NHp // t_nh
    tm1 = t_nh * W                                   # flat rows per pass-1 step

    # ---- Build the 4-slab input (original, un-dilated input only) ----------
    # TODO(synk): the 4 shift slabs could be built in-kernel from a single
    # padded copy of x (4 shifted DMAs) to save this input-sized XLA pass.
    x = jnp.transpose(x_nchw, (0, 2, 3, 1)).astype(compute_dtype)      # NHWC
    x01 = jnp.pad(x[:, :, 1:, :], ((0, 0), (0, 0), (0, 1), (0, 0)))    # (r,   c+1)
    x10 = jnp.pad(x[:, 1:, :, :], ((0, 0), (0, 1), (0, 0), (0, 0)))    # (r+1, c  )
    x11 = jnp.pad(x[:, 1:, 1:, :], ((0, 0), (0, 1), (0, 1), (0, 0)))   # (r+1, c+1)
    x4 = jnp.concatenate([x, x01, x10, x11], axis=-1).reshape(NH, W, Kc)
    x4 = jnp.pad(x4, ((0, NHp - NH), (0, 0), (0, Kcp - Kc)))           # (NHp,W,Kcp)
    x4_flat = x4.reshape(NHp * W, Kcp)                                 # free view

    # ---- Phase weights: out[n, 2r+pr, 2c+pc, co] ---------------------------
    # (even,even): x00*w[1,1]
    # (even,odd ): x00*w[1,2] + x01*w[1,0]
    # (odd ,even): x00*w[2,1] + x10*w[0,1]
    # (odd ,odd ): x00*w[2,2] + x01*w[2,0] + x10*w[0,2] + x11*w[0,0]
    w = w_t.astype(jnp.float32)
    Z = jnp.zeros((Cin, Cout), jnp.float32)
    wb = lambda kh, kw: w[:, :, kh, kw]
    phase_blocks = [
        [wb(1, 1), Z, Z, Z],
        [wb(1, 2), wb(1, 0), Z, Z],
        [wb(2, 1), Z, wb(0, 1), Z],
        [wb(2, 2), wb(2, 0), wb(0, 2), wb(0, 0)],
    ]
    w_big = jnp.concatenate(
        [jnp.pad(jnp.concatenate(blks, axis=0), ((0, 0), (0, Coutp - Cout)))
         for blks in phase_blocks], axis=1)                            # (Kc, C4)
    w_big = jnp.pad(w_big, ((0, Kcp - Kc), (0, 0))).astype(compute_dtype)

    cparams = pltpu.CompilerParams(
        dimension_semantics=("parallel",),
        vmem_limit_bytes=vmem_limit)

    # ---- Pass 1: BN partial sums (stats only) -------------------------------
    cost1 = pl.CostEstimate(
        flops=2 * NHp * W * Kcp * C4, transcendentals=0,
        bytes_accessed=(NHp * W * Kcp + Kcp * C4) * itemsize
                       + grid_nh * 2 * C4 * 4)
    stats = pl.pallas_call(
        _stats_kernel,
        grid=(grid_nh,),
        in_specs=[
            pl.BlockSpec((tm1, Kcp), lambda i: (i, 0)),
            pl.BlockSpec((Kcp, C4), lambda i: (0, 0)),
        ],
        out_specs=pl.BlockSpec((1, 2, C4), lambda i: (i, 0, 0)),
        out_shape=jax.ShapeDtypeStruct((grid_nh, 2, C4), jnp.float32),
        compiler_params=cparams,
        cost_estimate=cost1,
    )(x4_flat, w_big)

    # ---- Fold tile stats into global BN scale/shift (tiny) ------------------
    count = float(N * OH * OW)
    s1 = jnp.sum(stats[:, 0, :], axis=0).reshape(4, Coutp).sum(axis=0)
    s2 = jnp.sum(stats[:, 1, :], axis=0).reshape(4, Coutp).sum(axis=0)
    mean = s1 / count
    var = jnp.maximum(s2 / count - mean * mean, 0.0)
    inv = lax.rsqrt(var + eps)
    gamma_p = jnp.pad(gamma.astype(jnp.float32), (0, Coutp - Cout))
    beta_p = jnp.pad(beta.astype(jnp.float32), (0, Coutp - Cout))
    scale = gamma_p * inv
    shift = beta_p - mean * scale                     # conv bias cancels in BN
    scale_row = jnp.tile(scale, 4).reshape(1, C4)
    shift_row = jnp.tile(shift, 4).reshape(1, C4)

    # ---- Pass 2: recompute conv + BN + ReLU, parity-interleaved stores ------
    cost2 = pl.CostEstimate(
        flops=2 * NHp * W * Kcp * C4 + 3 * NHp * W * C4, transcendentals=0,
        bytes_accessed=(NHp * W * Kcp + Kcp * C4) * itemsize
                       + NHp * 2 * W * c_half * 4 + 2 * C4 * 4)
    out4 = pl.pallas_call(
        functools.partial(_conv_bn_relu_kernel, c_half=c_half),
        grid=(grid_nh,),
        in_specs=[
            pl.BlockSpec((t_nh, W, Kcp), lambda i: (i, 0, 0)),
            pl.BlockSpec((Kcp, C4), lambda i: (0, 0)),
            pl.BlockSpec((1, C4), lambda i: (0, 0)),
            pl.BlockSpec((1, C4), lambda i: (0, 0)),
        ],
        out_specs=pl.BlockSpec((t_nh, 2, W, c_half), lambda i: (i, 0, 0, 0)),
        out_shape=jax.ShapeDtypeStruct((NHp, 2, W, c_half), jnp.float32),
        compiler_params=cparams,
        cost_estimate=cost2,
    )(x4, w_big, scale_row, shift_row)

    # ---- Tail: free reshapes + one fused slice/transpose to NCHW ------------
    y = out4[:NH].reshape(N, H, 2, W, 2, Coutp)       # metadata-only reshape
    y = y.reshape(N, OH, OW, Coutp)[..., :Cout]       # merge adjacent dims
    return jnp.transpose(y, (0, 3, 1, 2))             # NHWC -> NCHW (one copy)


def upsampling_reference(x_nchw, w_t, bias, gamma, beta, *, eps=1e-5):
    """Pure-JAX reference mirroring the PyTorch forward (for validation)."""
    x = jnp.transpose(x_nchw, (0, 2, 3, 1))
    wf = jnp.transpose(w_t[:, :, ::-1, ::-1], (2, 3, 0, 1))
    conv = jax.lax.conv_general_dilated(
        x, wf, window_strides=(1, 1), padding=((1, 2), (1, 2)),
        lhs_dilation=(2, 2),
        dimension_numbers=("NHWC", "HWIO", "NHWC")) + bias
    mean = conv.mean(axis=(0, 1, 2))
    var = jnp.square(conv - mean).mean(axis=(0, 1, 2))
    y = (conv - mean) * jax.lax.rsqrt(var + eps) * gamma + beta
    y = jnp.maximum(y, 0.0)
    return jnp.transpose(y, (0, 3, 1, 2))


if __name__ == "__main__":
    def check(N, Cin, Cout, H, W, *, compute_dtype, atol, rtol, seed, tag):
        key = jax.random.fold_in(jax.random.PRNGKey(0), seed)
        kx, kw, kb, kg, kbe = jax.random.split(key, 5)
        x = jax.random.normal(kx, (N, Cin, H, W), dtype=jnp.float32)
        # PyTorch ConvTranspose2d weight layout: (in_channels, out_channels, kH, kW)
        w_t = 0.1 * jax.random.normal(kw, (Cin, Cout, 3, 3), dtype=jnp.float32)
        bias = 0.1 * jax.random.normal(kb, (Cout,), dtype=jnp.float32)
        gamma = 1.0 + 0.1 * jax.random.normal(kg, (Cout,), dtype=jnp.float32)
        beta = 0.1 * jax.random.normal(kbe, (Cout,), dtype=jnp.float32)

        fwd = jax.jit(functools.partial(upsampling_forward,
                                        compute_dtype=compute_dtype))
        out = jax.block_until_ready(fwd(x, w_t, bias, gamma, beta))
        assert out.shape == (N, Cout, 2 * H, 2 * W), out.shape
        ref = upsampling_reference(x, w_t, bias, gamma, beta)
        if not jnp.allclose(out, ref, atol=atol, rtol=rtol):
            err = float(jnp.max(jnp.abs(out - ref)))
            raise AssertionError(f"[{tag}] mismatch vs reference, max abs err = {err}")

    # Main config (bf16 MXU inputs, f32 accumulation): 2x4x16x16 -> 2x8x32x32.
    check(2, 4, 8, 16, 16, compute_dtype=jnp.bfloat16,
          atol=4e-2, rtol=3e-2, seed=1, tag="main_bf16")
    # Ragged config (f32 path) exercising NH/W padding and the odd-W tiling.
    check(2, 3, 8, 7, 9, compute_dtype=jnp.float32,
          atol=2e-4, rtol=2e-4, seed=2, tag="ragged_f32")

    print("KERNEL_OK")
</pallas_src>

<mosaic_0001>
module attributes {stable_mosaic.version = 11 : i64} {
  func.func @_stats_kernel(%arg0: i32, %arg1: memref<256x16xbf16, #tpu.memory_space<vmem>>, %arg2: memref<16x256xbf16, #tpu.memory_space<vmem>>, %arg3: memref<1x2x256xf32, #tpu.memory_space<vmem>>) attributes {dimension_semantics = [#tpu.dimension_semantics<parallel>], iteration_bounds = array<i64: 2>, scalar_prefetch = 0 : i64, scratch_operands = 0 : i64, tpu.core_type = #tpu.core_type<tc>, window_params = [{transform_indices = @transform_0, window_bounds = array<i64: 256, 16>}, {pipeline_mode = #tpu.pipeline_mode<synchronous>, transform_indices = @transform_1, window_bounds = array<i64: 16, 256>}, {transform_indices = @transform_2, window_bounds = array<i64: 1, 2, 256>}]} {
    %c0 = arith.constant 0 : index
    %c0_0 = arith.constant 0 : index
    %0 = vector.load %arg1[%c0, %c0_0] : memref<256x16xbf16, #tpu.memory_space<vmem>>, vector<256x16xbf16>
    %c0_1 = arith.constant 0 : index
    %c0_2 = arith.constant 0 : index
    %1 = vector.load %arg2[%c0_1, %c0_2] : memref<16x256xbf16, #tpu.memory_space<vmem>>, vector<16x256xbf16>
    %cst = arith.constant dense<0.000000e+00> : vector<256x256xf32>
    %2 = tpu.matmul %0, %1, %cst {dimension_numbers = #tpu.dot_dimension_numbers<[1], [0], [0], [1], [0, 0, 1, 1], [], []>} : vector<256x16xbf16>, vector<16x256xbf16>, vector<256x256xf32> -> vector<256x256xf32>
    %cst_3 = arith.constant dense<0.000000e+00> : vector<256xf32>
    %3 = vector.multi_reduction <add>, %2, %cst_3 [0] : vector<256x256xf32> to vector<256xf32>
    %4 = vector.shape_cast %3 : vector<256xf32> to vector<1x256xf32>
    %5 = arith.mulf %2, %2 : vector<256x256xf32>
    %cst_4 = arith.constant dense<0.000000e+00> : vector<256xf32>
    %6 = vector.multi_reduction <add>, %5, %cst_4 [0] : vector<256x256xf32> to vector<256xf32>
    %7 = vector.shape_cast %6 : vector<256xf32> to vector<1x256xf32>
    %8 = tpu.concatenate %4, %7 in 0 : vector<1x256xf32>, vector<1x256xf32> -> vector<2x256xf32>
    %9 = vector.shape_cast %8 : vector<2x256xf32> to vector<1x2x256xf32>
    %c0_5 = arith.constant 0 : index
    %c0_6 = arith.constant 0 : index
    %c0_7 = arith.constant 0 : index
    %10 = vector.load %arg3[%c0_5, %c0_6, %c0_7] : memref<1x2x256xf32, #tpu.memory_space<vmem>>, vector<1x2x256xf32>
    tpu.vector_store %arg3[%c0_5, %c0_6, %c0_7], %9 {strides = array<i32>} : memref<1x2x256xf32, #tpu.memory_space<vmem>>, vector<1x2x256xf32>,
    return
  }
  func.func @transform_0(%arg0: i32) -> (i32, i32) {
    %c0_i32 = arith.constant 0 : i32
    %c0_i32_0 = arith.constant 0 : i32
    return %arg0, %c0_i32 : i32, i32
  }
  func.func @transform_1(%arg0: i32) -> (i32, i32) {
    %c0_i32 = arith.constant 0 : i32
    %c0_i32_0 = arith.constant 0 : i32
    %c0_i32_1 = arith.constant 0 : i32
    return %c0_i32, %c0_i32_0 : i32, i32
  }
  func.func @transform_2(%arg0: i32) -> (i32, i32, i32) {
    %c0_i32 = arith.constant 0 : i32
    %c0_i32_0 = arith.constant 0 : i32
    %c0_i32_1 = arith.constant 0 : i32
    return %arg0, %c0_i32, %c0_i32_0 : i32, i32, i32
  }
}

module attributes {stable_mosaic.version = 11 : i64} {
  func.func @_conv_bn_relu_kernel(%arg0: i32, %arg1: memref<16x16x16xbf16, #tpu.memory_space<vmem>>, %arg2: memref<16x256xbf16, #tpu.memory_space<vmem>>, %arg3: memref<1x256xf32, #tpu.memory_space<vmem>>, %arg4: memref<1x256xf32, #tpu.memory_space<vmem>>, %arg5: memref<16x2x16x128xf32, #tpu.memory_space<vmem>>) attributes {dimension_semantics = [#tpu.dimension_semantics<parallel>], iteration_bounds = array<i64: 2>, scalar_prefetch = 0 : i64, scratch_operands = 0 : i64, tpu.core_type = #tpu.core_type<tc>, window_params = [{transform_indices = @transform_0, window_bounds = array<i64: 16, 16, 16>}, {pipeline_mode = #tpu.pipeline_mode<synchronous>, transform_indices = @transform_1, window_bounds = array<i64: 16, 256>}, {pipeline_mode = #tpu.pipeline_mode<synchronous>, transform_indices = @transform_2, window_bounds = array<i64: 1, 256>}, {pipeline_mode = #tpu.pipeline_mode<synchronous>, transform_indices = @transform_3, window_bounds = array<i64: 1, 256>}, {transform_indices = @transform_4, window_bounds = array<i64: 16, 2, 16, 128>}]} {
    %c0 = arith.constant 0 : index
    %c0_0 = arith.constant 0 : index
    %0 = vector.load %arg2[%c0, %c0_0] : memref<16x256xbf16, #tpu.memory_space<vmem>>, vector<16x256xbf16>
    %c0_1 = arith.constant 0 : index
    %c0_2 = arith.constant 0 : index
    %1 = vector.load %arg3[%c0_1, %c0_2] : memref<1x256xf32, #tpu.memory_space<vmem>>, vector<1x256xf32>
    %2 = vector.shape_cast %1 : vector<1x256xf32> to vector<1x256xf32>
    %3 = vector.broadcast %2 : vector<1x256xf32> to vector<16x256xf32>
    %c0_3 = arith.constant 0 : index
    %c0_4 = arith.constant 0 : index
    %4 = vector.load %arg4[%c0_3, %c0_4] : memref<1x256xf32, #tpu.memory_space<vmem>>, vector<1x256xf32>
    %5 = vector.shape_cast %4 : vector<1x256xf32> to vector<1x256xf32>
    %6 = vector.broadcast %5 : vector<1x256xf32> to vector<16x256xf32>
    %c0_i32 = arith.constant 0 : i32
    %c16_i32 = arith.constant 16 : i32
    %7 = arith.addi %c0_i32, %c16_i32 : i32
    %c1_i32 = arith.constant 1 : i32
    scf.for %arg6 = %c0_i32 to %7 step %c1_i32  : i32 {
      %8 = arith.index_cast %arg6 : i32 to index
      %c0_6 = arith.constant 0 : index
      %c0_7 = arith.constant 0 : index
      %9 = vector.load %arg1[%8, %c0_6, %c0_7] : memref<16x16x16xbf16, #tpu.memory_space<vmem>>, vector<1x16x16xbf16>
      %10 = vector.shape_cast %9 : vector<1x16x16xbf16> to vector<16x16xbf16>
      %cst = arith.constant dense<0.000000e+00> : vector<16x256xf32>
      %11 = tpu.matmul %10, %0, %cst {dimension_numbers = #tpu.dot_dimension_numbers<[1], [0], [0], [1], [0, 0, 1, 1], [], []>} : vector<16x16xbf16>, vector<16x256xbf16>, vector<16x256xf32> -> vector<16x256xf32>
      %12 = arith.mulf %11, %3 : vector<16x256xf32>
      %13 = arith.addf %12, %6 : vector<16x256xf32>
      %cst_8 = arith.constant 0.000000e+00 : f32
      %14 = vector.broadcast %cst_8 : f32 to vector<16x256xf32>
      %15 = arith.maximumf %13, %14 : vector<16x256xf32>
      %16 = vector.extract_strided_slice %15 {offsets = [0, 0], sizes = [16, 128], strides = [1, 1]} : vector<16x256xf32> to vector<16x128xf32>
      %17 = arith.index_cast %arg6 : i32 to index
      %c0_9 = arith.constant 0 : index
      %c0_10 = arith.constant 0 : index
      %c0_11 = arith.constant 0 : index
      %18 = vector.load %arg5[%17, %c0_9, %c0_10, %c0_11] : memref<16x2x16x128xf32, #tpu.memory_space<vmem>>, vector<1x1x16x128xf32>
      %19 = vector.shape_cast %18 : vector<1x1x16x128xf32> to vector<16x128xf32>
      %20 = vector.shape_cast %16 : vector<16x128xf32> to vector<1x1x16x128xf32>
      tpu.vector_store %arg5[%17, %c0_9, %c0_10, %c0_11], %20 {strides = array<i32>} : memref<16x2x16x128xf32, #tpu.memory_space<vmem>>, vector<1x1x16x128xf32>,
      %21 = vector.extract_strided_slice %15 {offsets = [0, 128], sizes = [16, 128], strides = [1, 1]} : vector<16x256xf32> to vector<16x128xf32>
      %22 = arith.index_cast %arg6 : i32 to index
      %c1 = arith.constant 1 : index
      %c0_12 = arith.constant 0 : index
      %c0_13 = arith.constant 0 : index
      %23 = vector.load %arg5[%22, %c1, %c0_12, %c0_13] : memref<16x2x16x128xf32, #tpu.memory_space<vmem>>, vector<1x1x16x128xf32>
      %24 = vector.shape_cast %23 : vector<1x1x16x128xf32> to vector<16x128xf32>
      %25 = vector.shape_cast %21 : vector<16x128xf32> to vector<1x1x16x128xf32>
      tpu.vector_store %arg5[%22, %c1, %c0_12, %c0_13], %25 {strides = array<i32>} : memref<16x2x16x128xf32, #tpu.memory_space<vmem>>, vector<1x1x16x128xf32>,
    }
    %c16_i32_5 = arith.constant 16 : i32
    return
  }
  func.func @transform_0(%arg0: i32) -> (i32, i32, i32) {
    %c0_i32 = arith.constant 0 : i32
    %c0_i32_0 = arith.constant 0 : i32
    %c0_i32_1 = arith.constant 0 : i32
    return %arg0, %c0_i32, %c0_i32_0 : i32, i32, i32
  }
  func.func @transform_1(%arg0: i32) -> (i32, i32) {
    %c0_i32 = arith.constant 0 : i32
    %c0_i32_0 = arith.constant 0 : i32
    %c0_i32_1 = arith.constant 0 : i32
    return %c0_i32, %c0_i32_0 : i32, i32
  }
  func.func @transform_2(%arg0: i32) -> (i32, i32) {
    %c0_i32 = arith.constant 0 : i32
    %c0_i32_0 = arith.constant 0 : i32
    %c0_i32_1 = arith.constant 0 : i32
    return %c0_i32, %c0_i32_0 : i32, i32
  }
  func.func @transform_3(%arg0: i32) -> (i32, i32) {
    %c0_i32 = arith.constant 0 : i32
    %c0_i32_0 = arith.constant 0 : i32
    %c0_i32_1 = arith.constant 0 : i32
    return %c0_i32, %c0_i32_0 : i32, i32
  }
  func.func @transform_4(%arg0: i32) -> (i32, i32, i32, i32) {
    %c0_i32 = arith.constant 0 : i32
    %c0_i32_0 = arith.constant 0 : i32
    %c0_i32_1 = arith.constant 0 : i32
    %c0_i32_2 = arith.constant 0 : i32
    return %arg0, %c0_i32, %c0_i32_0, %c0_i32_1 : i32, i32, i32, i32
  }
}

</mosaic_0001>

<llo_original>
// kernel: tile.18
$region0: #{tile.18}
  #allocation0 [shape = 's32[1]{0}', space=sflag, size = 0x4, scoped, tag = 'scoped memory for tile.18']
  %s0 = inlined_call_operand.vmem [shape: f32[64], index: 0, kind: input, shape index: {}]
  %s1 = inlined_call_operand.vmem [shape: f32[4,64], index: 1, kind: output, shape index: {}]
  // Predicated region
  $region2: #{tile.18} parent=0 // pred_check
    _
  $region3: #{tile.18} parent=0 // pred_check_branch
    %3 = sbr.rel (0) target = $region5
  $region4: #{tile.18} parent=0 // pred_region
    _
  $region5: #{tile.18} parent=0 // pred_fallthru
    _
  %v4 = vld [vmem:[%s0] ss:$0 sm:$0xff]
  %5 = vst [vmem:[%s1] sm:$0xf] %v4

// kernel: tile.19
$region0: #{tile.19}
  %s0 = inlined_call_operand.vmem [shape: f32[4,64], index: 0, kind: input, shape index: {}]
  %s1 = inlined_call_operand.vmem [shape: f32[1,256], index: 1, kind: output, shape index: {}]
  $region1: #{tile.19} parent=0
    #allocation0 [shape = 'u8[8192]{0}', space=vmem, size = 0x2000, scoped, tag = 'scoped mem for output reshape']
    #allocation1 [shape = 'u8[4096]{0}', space=vmem, size = 0x1000, scoped, tag = 'scoped mem for input reshape']
    %s3 = sshll.u32 1, 4
    %s4 = ssub.s32 %s3, 1
    %v5 = vld [vmem:[%s0] sm:%s4]
    %6 = vst [vmem:[#allocation1] sm:%s4] %v5
    %s7 = smov 3
    %v8 = vld [vmem:[#allocation1] ss:$2 sm:%s7]
    %vm9 = vcmask 523264
    %10 = vst.msk [vmem:[#allocation0] ss:$8 sm:$0x3] %vm9, %v8
    %s11 = scalar_lea.vmem [#allocation1], 1
    %s12 = smov 3
    %v13 = vld [vmem:[%s11] ss:$2 sm:%s12]
    %14 = vrot.lane.b32.xlu0 %v13, 64
    %v15 = vpop.permute.xlu0 %14
    %vm16 = vcmask 1048064
    %17 = vst.msk [vmem:[#allocation0] ss:$8 sm:$0x3] %vm16, %v15
    %s19 = sshll.u32 1, 1
    %s20 = ssub.s32 %s19, 1
    %v22 = vld [vmem:[#allocation0] sm:%s20]
    %s23 = sshll.u32 1, 1
    %s24 = ssub.s32 %s23, 1
    %25 = vst [vmem:[%s1] sm:%s24] %v22
    %s26 = scalar_lea.vmem [#allocation0], 8
    %v27 = vld [vmem:[%s26] sm:%s20]
    %s28 = sshll.u32 1, 1
    %s29 = ssub.s32 %s28, 1
    %s30 = scalar_lea.vmem %s1, 1
    %31 = vst [vmem:[%s30] sm:%s29] %v27

// kernel: upsampling_forward.3
$region0: #{upsampling_forward.3}
  #allocation0 [shape = 'u32[]', space=smem, size = 0x4, offset = 0x4, fixed_abs, tag = 'smem constant byte address 0x4 - core index']
  #allocation1 [shape = 'u32[144,128]{1,0:T(1,128)}', space=vmem, size = 0x12000, scoped, tag = 'internal scratch']
  %s0 = inlined_call_operand.vmem [shape: bf16[32,16,16], index: 0, kind: input, shape index: {}]
  %s1 = inlined_call_operand.vmem [shape: bf16[16,256], index: 1, kind: input, shape index: {}]
  %s2 = inlined_call_operand.vmem [shape: f32[1,256], index: 2, kind: input, shape index: {}]
  %s3 = inlined_call_operand.vmem [shape: f32[1,256], index: 3, kind: input, shape index: {}]
  %s4 = inlined_call_operand.vmem [shape: f32[32,2,16,128], index: 4, kind: output, shape index: {}]
  %s5 = sld [smem:[#allocation0]]
  $region56: #{upsampling_forward.3} parent=0
    _
  %s7 = ssub.s32 1, %s5
  %s8 = scalar_select 0, %s7, %s5
  loop: start=0, step=1, limit=4
  $region2: #{upsampling_forward.3} parent=0 // loop_pre_header
    _
  $region3: #{upsampling_forward.3} parent=0 // loop_header
    %s10 = sphi 0, %s14
    %p11 = scmp.ge.s32.totalorder %s10, 4
    %s20 = sphi 0, %s22
    %s23 = sphi 0, %s20
    %s24 = sphi 0, %s23
    %s40 = sphi 0, %s24
    %s44 = sphi 0, %s44
    %s46 = sphi 0, %s44
    %s47 = sphi 0, %s46
    %s61 = sphi 0, %s47
    %s65 = sphi 0, %s65
    %s67 = sphi 0, %s65
    %s68 = sphi 0, %s67
    %s82 = sphi 0, %s68
    %s86 = sphi 0, %s86
    %s88 = sphi 0, %s86
    %s89 = sphi 0, %s88
    %s103 = sphi 0, %s89
    %s109 = sphi 0, %s111
    %s112 = sphi 0, %s109
    %s113 = sphi 0, %s112
    %s129 = sphi 0, %s113
  $region4: #{upsampling_forward.3} parent=0 // loop_header_branch
    %13 = sbr.rel (%p11) target = $region8
  $region5: #{upsampling_forward.3} parent=0 // loop_body
    %s15 = ssub.s32 %s10, 1
    %s16 = ssub.s32 %s10, 2
    %s17 = sadd.s32 %s10, 1
    %s18 = ssub.s32 %s10, %s17
    %p19 = scmp.eq.s32.totalorder %s18, 0
    %s21 = sadd.s32 %s20, 1
    %s22 = scalar_select %p19, %s20, %s21
    %p25 = pneg %p19
    %p26 = scmp.eq.s32.totalorder %s10, 1
    %p27 = por %p25, %p26
    %p28 = scmp.ne.s32.totalorder %s20, %s23
    %p29 = scmp.eq.s32.totalorder %s10, 0
    %p30 = por %p28, %p29
    %p31 = scmp.ne.s32.totalorder %s20, %s23
    %p32 = scmp.eq.s32.totalorder %s15, 1
    %p33 = por %p31, %p32
    %p34 = scmp.ne.s32.totalorder %s23, %s24
    %p35 = scmp.eq.s32.totalorder %s15, 0
    %p36 = por %p34, %p35
    %p37 = scmp.ne.s32.totalorder %s23, %s24
    %p38 = scmp.eq.s32.totalorder %s16, 1
    %p39 = por %p37, %p38
    %p41 = scmp.ne.s32.totalorder %s24, %s40
    %p42 = scmp.eq.s32.totalorder %s16, 0
    %p43 = por %p41, %p42
    %s45 = sadd.s32 %s44, 1
    %p48 = scmp.eq.s32.totalorder %s10, 1
    %p49 = scmp.ne.s32.totalorder %s44, %s46
    %p50 = scmp.eq.s32.totalorder %s10, 0
    %p51 = por %p49, %p50
    %p52 = scmp.ne.s32.totalorder %s44, %s46
    %p53 = scmp.eq.s32.totalorder %s15, 1
    %p54 = por %p52, %p53
    %p55 = scmp.ne.s32.totalorder %s46, %s47
    %p56 = scmp.eq.s32.totalorder %s15, 0
    %p57 = por %p55, %p56
    %p58 = scmp.ne.s32.totalorder %s46, %s47
    %p59 = scmp.eq.s32.totalorder %s16, 1
    %p60 = por %p58, %p59
    %p62 = scmp.ne.s32.totalorder %s47, %s61
    %p63 = scmp.eq.s32.totalorder %s16, 0
    %p64 = por %p62, %p63
    %s66 = sadd.s32 %s65, 1
    %p69 = scmp.eq.s32.totalorder %s10, 1
    %p70 = scmp.ne.s32.totalorder %s65, %s67
    %p71 = scmp.eq.s32.totalorder %s10, 0
    %p72 = por %p70, %p71
    %p73 = scmp.ne.s32.totalorder %s65, %s67
    %p74 = scmp.eq.s32.totalorder %s15, 1
    %p75 = por %p73, %p74
    %p76 = scmp.ne.s32.totalorder %s67, %s68
    %p77 = scmp.eq.s32.totalorder %s15, 0
    %p78 = por %p76, %p77
    %p79 = scmp.ne.s32.totalorder %s67, %s68
    %p80 = scmp.eq.s32.totalorder %s16, 1
    %p81 = por %p79, %p80
    %p83 = scmp.ne.s32.totalorder %s68, %s82
    %p84 = scmp.eq.s32.totalorder %s16, 0
    %p85 = por %p83, %p84
    %s87 = sadd.s32 %s86, 1
    %p90 = scmp.eq.s32.totalorder %s10, 1
    %p91 = scmp.ne.s32.totalorder %s86, %s88
    %p92 = scmp.eq.s32.totalorder %s10, 0
    %p93 = por %p91, %p92
    %p94 = scmp.ne.s32.totalorder %s86, %s88
    %p95 = scmp.eq.s32.totalorder %s15, 1
    %p96 = por %p94, %p95
    %p97 = scmp.ne.s32.totalorder %s88, %s89
    %p98 = scmp.eq.s32.totalorder %s15, 0
    %p99 = por %p97, %p98
    %p100 = scmp.ne.s32.totalorder %s88, %s89
    %p101 = scmp.eq.s32.totalorder %s16, 1
    %p102 = por %p100, %p101
    %p104 = scmp.ne.s32.totalorder %s89, %s103
    %p105 = scmp.eq.s32.totalorder %s16, 0
    %p106 = por %p104, %p105
    %s107 = ssub.s32 %s10, %s17
    %p108 = scmp.eq.s32.totalorder %s107, 0
    %s110 = sadd.s32 %s109, 1
    %s111 = scalar_select %p108, %s109, %s110
    %p114 = pneg %p108
    %p115 = scmp.eq.s32.totalorder %s10, 1
    %p116 = por %p114, %p115
    %p117 = scmp.ne.s32.totalorder %s109, %s112
    %p118 = scmp.eq.s32.totalorder %s10, 0
    %p119 = por %p117, %p118
    %p120 = scmp.ne.s32.totalorder %s109, %s112
    %p121 = scmp.eq.s32.totalorder %s15, 1
    %p122 = por %p120, %p121
    %p123 = scmp.ne.s32.totalorder %s112, %s113
    %p124 = scmp.eq.s32.totalorder %s15, 0
    %p125 = por %p123, %p124
    %p126 = scmp.ne.s32.totalorder %s112, %s113
    %p127 = scmp.eq.s32.totalorder %s16, 1
    %p128 = por %p126, %p127
    %p130 = scmp.ne.s32.totalorder %s113, %s129
    %p131 = scmp.eq.s32.totalorder %s16, 0
    %p132 = por %p130, %p131
    %p133 = scmp.le.s32.totalorder 1, %s10
    %p134 = scmp.lt.s32.totalorder %s10, 3
    %p135 = pnand %p133, %p134
    %p136 = pneg %p135
    // Predicated region
    $region9: #{upsampling_forward.3} parent=5 // pred_check
      _
    $region10: #{upsampling_forward.3} parent=5 // pred_check_branch
      %138 = sbr.rel (%p135) target = $region12
    $region11: #{upsampling_forward.3} parent=5 // pred_region
      %s139 = ssub.s32 %s10, 1
      // Predicated region
      $region13: #{upsampling_forward.3} parent=11 // pred_check
        %p140 = pneg %p57
      $region14: #{upsampling_forward.3} parent=11 // pred_check_branch
        %142 = sbr.rel (%p140) target = $region16
      $region15: #{upsampling_forward.3} parent=11 // pred_region
        _
      $region16: #{upsampling_forward.3} parent=11 // pred_fallthru
        _
      // Predicated region
      $region17: #{upsampling_forward.3} parent=11 // pred_check
        %p143 = pneg %p78
      $region18: #{upsampling_forward.3} parent=11 // pred_check_branch
        %145 = sbr.rel (%p143) target = $region20
      $region19: #{upsampling_forward.3} parent=11 // pred_region
        _
      $region20: #{upsampling_forward.3} parent=11 // pred_fallthru
        _
      // Predicated region
      $region21: #{upsampling_forward.3} parent=11 // pred_check
        %p146 = pneg %p99
      $region22: #{upsampling_forward.3} parent=11 // pred_check_branch
        %148 = sbr.rel (%p146) target = $region24
      $region23: #{upsampling_forward.3} parent=11 // pred_region
        _
      $region24: #{upsampling_forward.3} parent=11 // pred_fallthru
        _
    $region12: #{upsampling_forward.3} parent=5 // pred_fallthru
      _
    %p149 = scmp.lt.s32.totalorder %s10, 2
    // Predicated region
    $region25: #{upsampling_forward.3} parent=5 // pred_check
      %p150 = pneg %p149
    $region26: #{upsampling_forward.3} parent=5 // pred_check_branch
      %152 = sbr.rel (%p150) target = $region28
    $region27: #{upsampling_forward.3} parent=5 // pred_region
      // Predicated region
      $region29: #{upsampling_forward.3} parent=27 // pred_check
        %p153 = pneg %p30
      $region30: #{upsampling_forward.3} parent=27 // pred_check_branch
        %155 = sbr.rel (%p153) target = $region32
      $region31: #{upsampling_forward.3} parent=27 // pred_region
        %s156 = smul.u32 16, %s10
        %p157 = scmp.lt.s32.totalorder %s156, 31
        %s158 = scalar_select %p157, %s156, 31
        %s159 = smul.addr %s158, 2
        %s160 = smul.addr %s159, 4
        %s161 = scalar_lea.vmem %s0, %s160
        %s162 = smul.u32 16, %s10
      $region32: #{upsampling_forward.3} parent=27 // pred_fallthru
        _
    $region28: #{upsampling_forward.3} parent=5 // pred_fallthru
      _
    %p163 = scmp.le.s32.totalorder 1, %s10
    %p164 = scmp.lt.s32.totalorder %s10, 3
    %p165 = pnand %p163, %p164
    %p166 = pneg %p165
    // Predicated region
    $region33: #{upsampling_forward.3} parent=5 // pred_check
      _
    $region34: #{upsampling_forward.3} parent=5 // pred_check_branch
      %168 = sbr.rel (%p165) target = $region36
    $region35: #{upsampling_forward.3} parent=5 // pred_region
      %s169 = ssub.s32 %s10, 1
      %s170 = smul.u32 16, %s15
      %p171 = scmp.lt.s32.totalorder %s170, 31
      %s172 = scalar_select %p171, %s170, 31
      %s173 = smul.addr %s172, 2
      %s174 = smul.addr %s173, 4
      %s175 = scalar_lea.vmem %s0, %s174
      %p176 = pneg %p36
      %p177 = pneg %p33
      %p178 = pneg %p57
      %p179 = pneg %p54
      %p180 = pneg %p78
      %p181 = pneg %p75
      %p182 = pneg %p99
      %p183 = pneg %p96
      %p184 = pneg %p125
      %p185 = pneg %p122
      %s186 = smul.u32 16, %s15
      %p187 = scmp.lt.s32.totalorder %s186, 31
      %s188 = scalar_select %p187, %s186, 31
      %s189 = smul.addr %s188, 4
      %s190 = smul.addr %s189, 8
      %s191 = scalar_lea.vmem %s4, %s190
      %s192 = smul.u32 16, %s15
      %p193 = scmp.lt.s32.totalorder %s192, 31
      %s194 = scalar_select %p193, %s192, 31
      %s195 = smul.addr %s194, 2
      %s196 = smul.addr %s195, 4
      %s197 = scalar_lea.vmem %s0, %s196
      %s198 = smul.u32 16, %s15
      %s199 = smul.u32 16, %s15
      %p200 = scmp.lt.s32.totalorder %s199, 31
      %s201 = scalar_select %p200, %s199, 31
      %s202 = smul.addr %s201, 4
      %s203 = smul.addr %s202, 8
      %s204 = scalar_lea.vmem %s4, %s203
      %s205 = smul.u32 16, %s15
      %v207 = vld [vmem:[%s1] sm:$0xff]
      %v208 = vld [vmem:[%s1 + $0x8] sm:$0xff]
      %v209 = vld [vmem:[%s2] sm:$0x3]
      %v211 = vlaneseq
      %v212 = vshrl.u32 %v211, 7
      %v213 = vsub.s32 0, %v212
      %v214 = vrot.slane %v209, %v213
      %v215 = vlaneseq
      %v216 = vshrl.u32 %v215, 7
      %v217 = vsub.s32 1, %v216
      %v218 = vrot.slane %v209, %v217
      %v221 = vld [vmem:[%s3] sm:$0x3]
      %v223 = vlaneseq
      %v224 = vshrl.u32 %v223, 7
      %v225 = vsub.s32 0, %v224
      %v226 = vrot.slane %v221, %v225
      %v227 = vlaneseq
      %v228 = vshrl.u32 %v227, 7
      %v229 = vsub.s32 1, %v228
      %v230 = vrot.slane %v221, %v229
      loop: start=0, step=1, limit=16
      $region37: #{upsampling_forward.3} parent=35 // loop_pre_header
        _
      $region38: #{upsampling_forward.3} parent=35 // loop_header
        %s234 = sphi 0, %s238
        %p235 = scmp.ge.s32.totalorder %s234, 16
      $region39: #{upsampling_forward.3} parent=35 // loop_header_branch
        %237 = sbr.rel (%p235) target = $region43
      $region40: #{upsampling_forward.3} parent=35 // loop_body
        %s239 = smul.u32 %s234, 2
        %s240 = smul.addr %s239, 4
        %s241 = scalar_lea.vmem %s197, %s240
        %v242 = vld [vmem:[%s241] sm:$0xf]
        %v243 = vld [vmem:[%s241 + $0x4] sm:$0xf]
        %v246 = vunpack.c.l.b16 %v242
        %v247 = vunpack.c.l.b16 %v243
        %v248 = vpack.c.b16 %v247, %v246
        %v251 = vunpack.c.l.b16 %v207
        %v252 = vunpack.c.h.b16 %v207
        %v253 = vunpack.c.l.b16 %v208
        %v254 = vunpack.c.h.b16 %v208
        %v255 = vpack.c.b16 %v253, %v251
        %v256 = vpack.c.b16 %v254, %v252
        %vm259 = vcmask 130048
        %v261 = vsel %vm259, %v248, 0
        %263 = vmatprep.subr.bf16.mxu0 0
        %264 = vmatpush1.bf16.msra.mxu0 0
        %265 = vmatprep.subr.bf16.mxu0 0
        %266 = vmatpush1.bf16.msra.mxu0 0
        %267 = vmatprep.subr.bf16.mxu0 0
        %268 = vmatpush1.bf16.msra.mxu0 0
        %269 = vmatprep.subr.bf16.mxu0 0
        %270 = vmatpush1.bf16.msra.mxu0 0
        %271 = vmatprep.subr.bf16.mxu0 0
        %272 = vmatpush1.bf16.msra.mxu0 0
        %273 = vmatprep.subr.bf16.mxu0 0
        %274 = vmatpush1.bf16.msra.mxu0 0
        %275 = vmatprep.subr.bf16.mxu0 0
        %276 = vmatpush1.bf16.msra.mxu0 0
        %277 = vmatprep.subr.bf16.mxu0 %v256
        %278 = vmatpush1.bf16.msra.mxu0 %v255
        %279 = vmatprep.subr.bf16.mxu0 0
        %280 = vmatpush2.bf16.msra.mxu0 0
        %281 = vmatprep.subr.bf16.mxu0 0
        %282 = vmatpush2.bf16.msra.mxu0 0
        %283 = vmatprep.subr.bf16.mxu0 0
        %284 = vmatpush2.bf16.msra.mxu0 0
        %285 = vmatprep.subr.bf16.mxu0 0
        %286 = vmatpush2.bf16.msra.mxu0 0
        %287 = vmatprep.subr.bf16.mxu0 0
        %288 = vmatpush2.bf16.msra.mxu0 0
        %289 = vmatprep.subr.bf16.mxu0 0
        %290 = vmatpush2.bf16.msra.mxu0 0
        %291 = vmatprep.subr.bf16.mxu0 0
        %292 = vmatpush2.bf16.msra.mxu0 0
        %293 = vmatprep.subr.bf16.mxu0 0
        %294 = vmatpush2.bf16.msra.mxu0 0
        %295 = vmatprep.mubr.bf16.mxu0 0
        %296 = vmatmul.mubr.bf16.gmra.mxu0 %v261
        %v297 = vpop.f32.mrf.mxu0
        %v298 = vadd.f32 0.0, %v297
        %v299 = vpop.f32.mrf.mxu0
        %v300 = vadd.f32 0.0, %v299
        %v301 = vpop.f32.mrf.mxu0
        %v302 = vadd.f32 0.0, %v301
        %v303 = vpop.f32.mrf.mxu0
        %v304 = vadd.f32 0.0, %v303
        %305 = vdwg.mxu0
        %v306 = vmul.f32 %v298, %v214
        %v307 = vmul.f32 %v300, %v218
        %v308 = vmul.f32 %v302, %v214
        %v309 = vmul.f32 %v304, %v218
        %v310 = vadd.f32 %v306, %v226
        %v311 = vadd.f32 %v307, %v230
        %v312 = vadd.f32 %v308, %v226
        %v313 = vadd.f32 %v309, %v230
        %v314 = vmax.f32 %v310, 0.0
        %v315 = vmax.f32 %v311, 0.0
        %v316 = vmax.f32 %v312, 0.0
        %v317 = vmax.f32 %v313, 0.0
        %s318 = smul.u32 %s234, 32
        %s319 = scalar_lea.vmem %s204, %s318
        %320 = vst [vmem:[%s319] sm:$0xff] %v314
        %321 = vst [vmem:[%s319 + $0x8] sm:$0xff] %v316
        %s322 = sadd.s32 16, %s318
        %s323 = scalar_lea.vmem %s204, %s322
        %324 = vst [vmem:[%s323] sm:$0xff] %v315
        %325 = vst [vmem:[%s323 + $0x8] sm:$0xff] %v317
      $region41: #{upsampling_forward.3} parent=35 // loop_footer
        %s238 = sadd.s32 1, %s234
      $region42: #{upsampling_forward.3} parent=35 // loop_footer_branch
        %233 = sbr.rel target = $region38
      $region43: #{upsampling_forward.3} parent=35 // loop_exit
        _
      %s326 = smul.u32 16, %s15
      %p327 = scmp.lt.s32.totalorder %s326, 31
      %s328 = scalar_select %p327, %s326, 31
      %s329 = smul.addr %s328, 4
      %s330 = smul.addr %s329, 8
      %s331 = scalar_lea.vmem %s4, %s330
      // Predicated region
      $region44: #{upsampling_forward.3} parent=35 // pred_check
        %p332 = pneg %p122
      $region45: #{upsampling_forward.3} parent=35 // pred_check_branch
        %334 = sbr.rel (%p332) target = $region47
      $region46: #{upsampling_forward.3} parent=35 // pred_region
        %s335 = smul.u32 16, %s15
      $region47: #{upsampling_forward.3} parent=35 // pred_fallthru
        _
    $region36: #{upsampling_forward.3} parent=5 // pred_fallthru
      _
    %p336 = scmp.le.s32.totalorder 2, %s10
    // Predicated region
    $region48: #{upsampling_forward.3} parent=5 // pred_check
      %p337 = pneg %p336
    $region49: #{upsampling_forward.3} parent=5 // pred_check_branch
      %339 = sbr.rel (%p337) target = $region51
    $region50: #{upsampling_forward.3} parent=5 // pred_region
      %s340 = ssub.s32 %s10, 2
      // Predicated region
      $region52: #{upsampling_forward.3} parent=50 // pred_check
        %p341 = pneg %p128
      $region53: #{upsampling_forward.3} parent=50 // pred_check_branch
        %343 = sbr.rel (%p341) target = $region55
      $region54: #{upsampling_forward.3} parent=50 // pred_region
        %s344 = smul.u32 16, %s16
        %p345 = scmp.lt.s32.totalorder %s344, 31
        %s346 = scalar_select %p345, %s344, 31
        %s347 = smul.addr %s346, 4
        %s348 = smul.addr %s347, 8
        %s349 = scalar_lea.vmem %s4, %s348
      $region55: #{upsampling_forward.3} parent=50 // pred_fallthru
        _
    $region51: #{upsampling_forward.3} parent=5 // pred_fallthru
      _
  $region6: #{upsampling_forward.3} parent=0 // loop_footer
    %s14 = sadd.s32 1, %s10
  $region7: #{upsampling_forward.3} parent=0 // loop_footer_branch
    %9 = sbr.rel target = $region3
  $region8: #{upsampling_forward.3} parent=0 // loop_exit
    _

// kernel: upsampling_forward.2
$region0: #{upsampling_forward.2}
  #allocation0 [shape = 'u32[]', space=smem, size = 0x4, offset = 0x4, fixed_abs, tag = 'smem constant byte address 0x4 - core index']
  #allocation1 [shape = 'u32[144,128]{1,0:T(1,128)}', space=vmem, size = 0x12000, scoped, tag = 'internal scratch']
  %s0 = inlined_call_operand.vmem [shape: bf16[512,16], index: 0, kind: input, shape index: {}]
  %s1 = inlined_call_operand.vmem [shape: bf16[16,256], index: 1, kind: input, shape index: {}]
  %s2 = inlined_call_operand.vmem [shape: f32[2,2,256], index: 2, kind: output, shape index: {}]
  %s3 = sld [smem:[#allocation0]]
  $region41: #{upsampling_forward.2} parent=0
    _
  %s5 = ssub.s32 1, %s3
  %s6 = scalar_select 0, %s5, %s3
  loop: start=0, step=1, limit=4
  $region2: #{upsampling_forward.2} parent=0 // loop_pre_header
    _
  $region3: #{upsampling_forward.2} parent=0 // loop_header
    %s8 = sphi 0, %s12
    %p9 = scmp.ge.s32.totalorder %s8, 4
    %s18 = sphi 0, %s20
    %s21 = sphi 0, %s18
    %s22 = sphi 0, %s21
    %s38 = sphi 0, %s22
    %s42 = sphi 0, %s42
    %s44 = sphi 0, %s42
    %s45 = sphi 0, %s44
    %s59 = sphi 0, %s45
    %s65 = sphi 0, %s67
    %s68 = sphi 0, %s65
    %s69 = sphi 0, %s68
    %s85 = sphi 0, %s69
  $region4: #{upsampling_forward.2} parent=0 // loop_header_branch
    %11 = sbr.rel (%p9) target = $region8
  $region5: #{upsampling_forward.2} parent=0 // loop_body
    %s13 = ssub.s32 %s8, 1
    %s14 = ssub.s32 %s8, 2
    %s15 = sadd.s32 %s8, 1
    %s16 = ssub.s32 %s8, %s15
    %p17 = scmp.eq.s32.totalorder %s16, 0
    %s19 = sadd.s32 %s18, 1
    %s20 = scalar_select %p17, %s18, %s19
    %p23 = pneg %p17
    %p24 = scmp.eq.s32.totalorder %s8, 1
    %p25 = por %p23, %p24
    %p26 = scmp.ne.s32.totalorder %s18, %s21
    %p27 = scmp.eq.s32.totalorder %s8, 0
    %p28 = por %p26, %p27
    %p29 = scmp.ne.s32.totalorder %s18, %s21
    %p30 = scmp.eq.s32.totalorder %s13, 1
    %p31 = por %p29, %p30
    %p32 = scmp.ne.s32.totalorder %s21, %s22
    %p33 = scmp.eq.s32.totalorder %s13, 0
    %p34 = por %p32, %p33
    %p35 = scmp.ne.s32.totalorder %s21, %s22
    %p36 = scmp.eq.s32.totalorder %s14, 1
    %p37 = por %p35, %p36
    %p39 = scmp.ne.s32.totalorder %s22, %s38
    %p40 = scmp.eq.s32.totalorder %s14, 0
    %p41 = por %p39, %p40
    %s43 = sadd.s32 %s42, 1
    %p46 = scmp.eq.s32.totalorder %s8, 1
    %p47 = scmp.ne.s32.totalorder %s42, %s44
    %p48 = scmp.eq.s32.totalorder %s8, 0
    %p49 = por %p47, %p48
    %p50 = scmp.ne.s32.totalorder %s42, %s44
    %p51 = scmp.eq.s32.totalorder %s13, 1
    %p52 = por %p50, %p51
    %p53 = scmp.ne.s32.totalorder %s44, %s45
    %p54 = scmp.eq.s32.totalorder %s13, 0
    %p55 = por %p53, %p54
    %p56 = scmp.ne.s32.totalorder %s44, %s45
    %p57 = scmp.eq.s32.totalorder %s14, 1
    %p58 = por %p56, %p57
    %p60 = scmp.ne.s32.totalorder %s45, %s59
    %p61 = scmp.eq.s32.totalorder %s14, 0
    %p62 = por %p60, %p61
    %s63 = ssub.s32 %s8, %s15
    %p64 = scmp.eq.s32.totalorder %s63, 0
    %s66 = sadd.s32 %s65, 1
    %s67 = scalar_select %p64, %s65, %s66
    %p70 = pneg %p64
    %p71 = scmp.eq.s32.totalorder %s8, 1
    %p72 = por %p70, %p71
    %p73 = scmp.ne.s32.totalorder %s65, %s68
    %p74 = scmp.eq.s32.totalorder %s8, 0
    %p75 = por %p73, %p74
    %p76 = scmp.ne.s32.totalorder %s65, %s68
    %p77 = scmp.eq.s32.totalorder %s13, 1
    %p78 = por %p76, %p77
    %p79 = scmp.ne.s32.totalorder %s68, %s69
    %p80 = scmp.eq.s32.totalorder %s13, 0
    %p81 = por %p79, %p80
    %p82 = scmp.ne.s32.totalorder %s68, %s69
    %p83 = scmp.eq.s32.totalorder %s14, 1
    %p84 = por %p82, %p83
    %p86 = scmp.ne.s32.totalorder %s69, %s85
    %p87 = scmp.eq.s32.totalorder %s14, 0
    %p88 = por %p86, %p87
    %p89 = scmp.le.s32.totalorder 1, %s8
    %p90 = scmp.lt.s32.totalorder %s8, 3
    %p91 = pnand %p89, %p90
    %p92 = pneg %p91
    // Predicated region
    $region9: #{upsampling_forward.2} parent=5 // pred_check
      _
    $region10: #{upsampling_forward.2} parent=5 // pred_check_branch
      %94 = sbr.rel (%p91) target = $region12
    $region11: #{upsampling_forward.2} parent=5 // pred_region
      %s95 = ssub.s32 %s8, 1
      // Predicated region
      $region13: #{upsampling_forward.2} parent=11 // pred_check
        %p96 = pneg %p55
      $region14: #{upsampling_forward.2} parent=11 // pred_check_branch
        %98 = sbr.rel (%p96) target = $region16
      $region15: #{upsampling_forward.2} parent=11 // pred_region
        _
      $region16: #{upsampling_forward.2} parent=11 // pred_fallthru
        _
    $region12: #{upsampling_forward.2} parent=5 // pred_fallthru
      _
    %p99 = scmp.lt.s32.totalorder %s8, 2
    // Predicated region
    $region17: #{upsampling_forward.2} parent=5 // pred_check
      %p100 = pneg %p99
    $region18: #{upsampling_forward.2} parent=5 // pred_check_branch
      %102 = sbr.rel (%p100) target = $region20
    $region19: #{upsampling_forward.2} parent=5 // pred_region
      // Predicated region
      $region21: #{upsampling_forward.2} parent=19 // pred_check
        %p103 = pneg %p28
      $region22: #{upsampling_forward.2} parent=19 // pred_check_branch
        %105 = sbr.rel (%p103) target = $region24
      $region23: #{upsampling_forward.2} parent=19 // pred_region
        %s106 = smul.u32 32, %s8
        %p107 = scmp.lt.s32.totalorder %s106, 63
        %s108 = scalar_select %p107, %s106, 63
        %s109 = smul.addr %s108, 4
        %s110 = scalar_lea.vmem %s0, %s109
        %s111 = smul.u32 32, %s8
      $region24: #{upsampling_forward.2} parent=19 // pred_fallthru
        _
    $region20: #{upsampling_forward.2} parent=5 // pred_fallthru
      _
    %p112 = scmp.le.s32.totalorder 1, %s8
    %p113 = scmp.lt.s32.totalorder %s8, 3
    %p114 = pnand %p112, %p113
    %p115 = pneg %p114
    // Predicated region
    $region25: #{upsampling_forward.2} parent=5 // pred_check
      _
    $region26: #{upsampling_forward.2} parent=5 // pred_check_branch
      %117 = sbr.rel (%p114) target = $region28
    $region27: #{upsampling_forward.2} parent=5 // pred_region
      %s118 = ssub.s32 %s8, 1
      %s119 = smul.u32 32, %s13
      %p120 = scmp.lt.s32.totalorder %s119, 63
      %s121 = scalar_select %p120, %s119, 63
      %s122 = smul.addr %s121, 4
      %s123 = scalar_lea.vmem %s0, %s122
      %p124 = pneg %p34
      %p125 = pneg %p31
      %p126 = pneg %p55
      %p127 = pneg %p52
      %p128 = pneg %p81
      %p129 = pneg %p78
      %p130 = scmp.lt.s32.totalorder %s13, 1
      %s131 = scalar_select %p130, %s13, 1
      %s132 = smul.addr %s131, 2
      %s133 = smul.addr %s132, 2
      %s134 = scalar_lea.vmem %s2, %s133
      %s135 = smul.u32 32, %s13
      %p136 = scmp.lt.s32.totalorder %s135, 63
      %s137 = scalar_select %p136, %s135, 63
      %s138 = smul.addr %s137, 4
      %s139 = scalar_lea.vmem %s0, %s138
      %s140 = smul.u32 32, %s13
      %p141 = scmp.lt.s32.totalorder %s13, 1
      %s142 = scalar_select %p141, %s13, 1
      %s143 = smul.addr %s142, 2
      %s144 = smul.addr %s143, 2
      %s145 = scalar_lea.vmem %s2, %s144
      %v147 = vld [vmem:[%s139] sm:$0xf]
      %v148 = vld [vmem:[%s139 + $0x4] sm:$0xf]
      %v149 = vld [vmem:[%s139 + $0x8] sm:$0xf]
      %v150 = vld [vmem:[%s139 + $0xc] sm:$0xf]
      %v151 = vld [vmem:[%s139 + $0x10] sm:$0xf]
      %v152 = vld [vmem:[%s139 + $0x14] sm:$0xf]
      %v153 = vld [vmem:[%s139 + $0x18] sm:$0xf]
      %v154 = vld [vmem:[%s139 + $0x1c] sm:$0xf]
      %v155 = vld [vmem:[%s139 + $0x20] sm:$0xf]
      %v156 = vld [vmem:[%s139 + $0x24] sm:$0xf]
      %v157 = vld [vmem:[%s139 + $0x28] sm:$0xf]
      %v158 = vld [vmem:[%s139 + $0x2c] sm:$0xf]
      %v159 = vld [vmem:[%s139 + $0x30] sm:$0xf]
      %v160 = vld [vmem:[%s139 + $0x34] sm:$0xf]
      %v161 = vld [vmem:[%s139 + $0x38] sm:$0xf]
      %v162 = vld [vmem:[%s139 + $0x3c] sm:$0xf]
      %v163 = vld [vmem:[%s139 + $0x40] sm:$0xf]
      %v164 = vld [vmem:[%s139 + $0x44] sm:$0xf]
      %v165 = vld [vmem:[%s139 + $0x48] sm:$0xf]
      %v166 = vld [vmem:[%s139 + $0x4c] sm:$0xf]
      %v167 = vld [vmem:[%s139 + $0x50] sm:$0xf]
      %v168 = vld [vmem:[%s139 + $0x54] sm:$0xf]
      %v169 = vld [vmem:[%s139 + $0x58] sm:$0xf]
      %v170 = vld [vmem:[%s139 + $0x5c] sm:$0xf]
      %v171 = vld [vmem:[%s139 + $0x60] sm:$0xf]
      %v172 = vld [vmem:[%s139 + $0x64] sm:$0xf]
      %v173 = vld [vmem:[%s139 + $0x68] sm:$0xf]
      %v174 = vld [vmem:[%s139 + $0x6c] sm:$0xf]
      %v175 = vld [vmem:[%s139 + $0x70] sm:$0xf]
      %v176 = vld [vmem:[%s139 + $0x74] sm:$0xf]
      %v177 = vld [vmem:[%s139 + $0x78] sm:$0xf]
      %v178 = vld [vmem:[%s139 + $0x7c] sm:$0xf]
      %v179 = vld [vmem:[%s1] sm:$0xff]
      %v180 = vld [vmem:[%s1 + $0x8] sm:$0xff]
      %v213 = vunpack.c.l.b16 %v147
      %v214 = vunpack.c.l.b16 %v148
      %v215 = vunpack.c.l.b16 %v149
      %v216 = vunpack.c.l.b16 %v150
      %v217 = vunpack.c.l.b16 %v151
      %v218 = vunpack.c.l.b16 %v152
      %v219 = vunpack.c.l.b16 %v153
      %v220 = vunpack.c.l.b16 %v154
      %v221 = vunpack.c.l.b16 %v155
      %v222 = vunpack.c.l.b16 %v156
      %v223 = vunpack.c.l.b16 %v157
      %v224 = vunpack.c.l.b16 %v158
      %v225 = vunpack.c.l.b16 %v159
      %v226 = vunpack.c.l.b16 %v160
      %v227 = vunpack.c.l.b16 %v161
      %v228 = vunpack.c.l.b16 %v162
      %v229 = vunpack.c.l.b16 %v163
      %v230 = vunpack.c.l.b16 %v164
      %v231 = vunpack.c.l.b16 %v165
      %v232 = vunpack.c.l.b16 %v166
      %v233 = vunpack.c.l.b16 %v167
      %v234 = vunpack.c.l.b16 %v168
      %v235 = vunpack.c.l.b16 %v169
      %v236 = vunpack.c.l.b16 %v170
      %v237 = vunpack.c.l.b16 %v171
      %v238 = vunpack.c.l.b16 %v172
      %v239 = vunpack.c.l.b16 %v173
      %v240 = vunpack.c.l.b16 %v174
      %v241 = vunpack.c.l.b16 %v175
      %v242 = vunpack.c.l.b16 %v176
      %v243 = vunpack.c.l.b16 %v177
      %v244 = vunpack.c.l.b16 %v178
      %v245 = vpack.c.b16 %v214, %v213
      %v246 = vpack.c.b16 %v216, %v215
      %v247 = vpack.c.b16 %v218, %v217
      %v248 = vpack.c.b16 %v220, %v219
      %v249 = vpack.c.b16 %v222, %v221
      %v250 = vpack.c.b16 %v224, %v223
      %v251 = vpack.c.b16 %v226, %v225
      %v252 = vpack.c.b16 %v228, %v227
      %v253 = vpack.c.b16 %v230, %v229
      %v254 = vpack.c.b16 %v232, %v231
      %v255 = vpack.c.b16 %v234, %v233
      %v256 = vpack.c.b16 %v236, %v235
      %v257 = vpack.c.b16 %v238, %v237
      %v258 = vpack.c.b16 %v240, %v239
      %v259 = vpack.c.b16 %v242, %v241
      %v260 = vpack.c.b16 %v244, %v243
      %v263 = vunpack.c.l.b16 %v179
      %v264 = vunpack.c.h.b16 %v179
      %v265 = vunpack.c.l.b16 %v180
      %v266 = vunpack.c.h.b16 %v180
      %v267 = vpack.c.b16 %v265, %v263
      %v268 = vpack.c.b16 %v266, %v264
      %vm271 = vcmask 130048
      %v273 = vsel %vm271, %v245, 0
      %v276 = vsel %vm271, %v246, 0
      %v279 = vsel %vm271, %v247, 0
      %v282 = vsel %vm271, %v248, 0
      %v285 = vsel %vm271, %v249, 0
      %v288 = vsel %vm271, %v250, 0
      %v291 = vsel %vm271, %v251, 0
      %v294 = vsel %vm271, %v252, 0
      %v297 = vsel %vm271, %v253, 0
      %v300 = vsel %vm271, %v254, 0
      %v303 = vsel %vm271, %v255, 0
      %v306 = vsel %vm271, %v256, 0
      %v309 = vsel %vm271, %v257, 0
      %v312 = vsel %vm271, %v258, 0
      %v315 = vsel %vm271, %v259, 0
      %v318 = vsel %vm271, %v260, 0
      %320 = vmatprep.subr.bf16.mxu0 0
      %321 = vmatpush1.bf16.msra.mxu0 0
      %322 = vmatprep.subr.bf16.mxu0 0
      %323 = vmatpush1.bf16.msra.mxu0 0
      %324 = vmatprep.subr.bf16.mxu0 0
      %325 = vmatpush1.bf16.msra.mxu0 0
      %326 = vmatprep.subr.bf16.mxu0 0
      %327 = vmatpush1.bf16.msra.mxu0 0
      %328 = vmatprep.subr.bf16.mxu0 0
      %329 = vmatpush1.bf16.msra.mxu0 0
      %330 = vmatprep.subr.bf16.mxu0 0
      %331 = vmatpush1.bf16.msra.mxu0 0
      %332 = vmatprep.subr.bf16.mxu0 0
      %333 = vmatpush1.bf16.msra.mxu0 0
      %334 = vmatprep.subr.bf16.mxu0 %v268
      %335 = vmatpush1.bf16.msra.mxu0 %v267
      %336 = vmatprep.subr.bf16.mxu0 0
      %337 = vmatpush2.bf16.msra.mxu0 0
      %338 = vmatprep.subr.bf16.mxu0 0
      %339 = vmatpush2.bf16.msra.mxu0 0
      %340 = vmatprep.subr.bf16.mxu0 0
      %341 = vmatpush2.bf16.msra.mxu0 0
      %342 = vmatprep.subr.bf16.mxu0 0
      %343 = vmatpush2.bf16.msra.mxu0 0
      %344 = vmatprep.subr.bf16.mxu0 0
      %345 = vmatpush2.bf16.msra.mxu0 0
      %346 = vmatprep.subr.bf16.mxu0 0
      %347 = vmatpush2.bf16.msra.mxu0 0
      %348 = vmatprep.subr.bf16.mxu0 0
      %349 = vmatpush2.bf16.msra.mxu0 0
      %350 = vmatprep.subr.bf16.mxu0 0
      %351 = vmatpush2.bf16.msra.mxu0 0
      %352 = vmatprep.mubr.bf16.mxu0 0
      %353 = vmatmul.mubr.bf16.gmra.mxu0 %v273
      %v354 = vpop.f32.mrf.mxu0
      %v355 = vadd.f32 0.0, %v354
      %v356 = vpop.f32.mrf.mxu0
      %v357 = vadd.f32 0.0, %v356
      %v358 = vpop.f32.mrf.mxu0
      %v359 = vadd.f32 0.0, %v358
      %v360 = vpop.f32.mrf.mxu0
      %v361 = vadd.f32 0.0, %v360
      %362 = vmatprep.mubr.bf16.mxu0 0
      %363 = vmatmul.mubr.bf16.gmra.mxu0 %v276
      %v364 = vpop.f32.mrf.mxu0
      %v365 = vadd.f32 0.0, %v364
      %v366 = vpop.f32.mrf.mxu0
      %v367 = vadd.f32 0.0, %v366
      %v368 = vpop.f32.mrf.mxu0
      %v369 = vadd.f32 0.0, %v368
      %v370 = vpop.f32.mrf.mxu0
      %v371 = vadd.f32 0.0, %v370
      %372 = vmatprep.mubr.bf16.mxu0 0
      %373 = vmatmul.mubr.bf16.gmra.mxu0 %v279
      %v374 = vpop.f32.mrf.mxu0
      %v375 = vadd.f32 0.0, %v374
      %v376 = vpop.f32.mrf.mxu0
      %v377 = vadd.f32 0.0, %v376
      %v378 = vpop.f32.mrf.mxu0
      %v379 = vadd.f32 0.0, %v378
      %v380 = vpop.f32.mrf.mxu0
      %v381 = vadd.f32 0.0, %v380
      %382 = vmatprep.mubr.bf16.mxu0 0
      %383 = vmatmul.mubr.bf16.gmra.mxu0 %v282
      %v384 = vpop.f32.mrf.mxu0
      %v385 = vadd.f32 0.0, %v384
      %v386 = vpop.f32.mrf.mxu0
      %v387 = vadd.f32 0.0, %v386
      %v388 = vpop.f32.mrf.mxu0
      %v389 = vadd.f32 0.0, %v388
      %v390 = vpop.f32.mrf.mxu0
      %v391 = vadd.f32 0.0, %v390
      %392 = vmatprep.mubr.bf16.mxu0 0
      %393 = vmatmul.mubr.bf16.gmra.mxu0 %v285
      %v394 = vpop.f32.mrf.mxu0
      %v395 = vadd.f32 0.0, %v394
      %v396 = vpop.f32.mrf.mxu0
      %v397 = vadd.f32 0.0, %v396
      %v398 = vpop.f32.mrf.mxu0
      %v399 = vadd.f32 0.0, %v398
      %v400 = vpop.f32.mrf.mxu0
      %v401 = vadd.f32 0.0, %v400
      %402 = vmatprep.mubr.bf16.mxu0 0
      %403 = vmatmul.mubr.bf16.gmra.mxu0 %v288
      %v404 = vpop.f32.mrf.mxu0
      %v405 = vadd.f32 0.0, %v404
      %v406 = vpop.f32.mrf.mxu0
      %v407 = vadd.f32 0.0, %v406
      %v408 = vpop.f32.mrf.mxu0
      %v409 = vadd.f32 0.0, %v408
      %v410 = vpop.f32.mrf.mxu0
      %v411 = vadd.f32 0.0, %v410
      %412 = vmatprep.mubr.bf16.mxu0 0
      %413 = vmatmul.mubr.bf16.gmra.mxu0 %v291
      %v414 = vpop.f32.mrf.mxu0
      %v415 = vadd.f32 0.0, %v414
      %v416 = vpop.f32.mrf.mxu0
      %v417 = vadd.f32 0.0, %v416
      %v418 = vpop.f32.mrf.mxu0
      %v419 = vadd.f32 0.0, %v418
      %v420 = vpop.f32.mrf.mxu0
      %v421 = vadd.f32 0.0, %v420
      %422 = vmatprep.mubr.bf16.mxu0 0
      %423 = vmatmul.mubr.bf16.gmra.mxu0 %v294
      %v424 = vpop.f32.mrf.mxu0
      %v425 = vadd.f32 0.0, %v424
      %v426 = vpop.f32.mrf.mxu0
      %v427 = vadd.f32 0.0, %v426
      %v428 = vpop.f32.mrf.mxu0
      %v429 = vadd.f32 0.0, %v428
      %v430 = vpop.f32.mrf.mxu0
      %v431 = vadd.f32 0.0, %v430
      %432 = vmatprep.mubr.bf16.mxu0 0
      %433 = vmatmul.mubr.bf16.gmra.mxu0 %v297
      %v434 = vpop.f32.mrf.mxu0
      %v435 = vadd.f32 0.0, %v434
      %v436 = vpop.f32.mrf.mxu0
      %v437 = vadd.f32 0.0, %v436
      %v438 = vpop.f32.mrf.mxu0
      %v439 = vadd.f32 0.0, %v438
      %v440 = vpop.f32.mrf.mxu0
      %v441 = vadd.f32 0.0, %v440
      %442 = vmatprep.mubr.bf16.mxu0 0
      %443 = vmatmul.mubr.bf16.gmra.mxu0 %v300
      %v444 = vpop.f32.mrf.mxu0
      %v445 = vadd.f32 0.0, %v444
      %v446 = vpop.f32.mrf.mxu0
      %v447 = vadd.f32 0.0, %v446
      %v448 = vpop.f32.mrf.mxu0
      %v449 = vadd.f32 0.0, %v448
      %v450 = vpop.f32.mrf.mxu0
      %v451 = vadd.f32 0.0, %v450
      %452 = vmatprep.mubr.bf16.mxu0 0
      %453 = vmatmul.mubr.bf16.gmra.mxu0 %v303
      %v454 = vpop.f32.mrf.mxu0
      %v455 = vadd.f32 0.0, %v454
      %v456 = vpop.f32.mrf.mxu0
      %v457 = vadd.f32 0.0, %v456
      %v458 = vpop.f32.mrf.mxu0
      %v459 = vadd.f32 0.0, %v458
      %v460 = vpop.f32.mrf.mxu0
      %v461 = vadd.f32 0.0, %v460
      %462 = vmatprep.mubr.bf16.mxu0 0
      %463 = vmatmul.mubr.bf16.gmra.mxu0 %v306
      %v464 = vpop.f32.mrf.mxu0
      %v465 = vadd.f32 0.0, %v464
      %v466 = vpop.f32.mrf.mxu0
      %v467 = vadd.f32 0.0, %v466
      %v468 = vpop.f32.mrf.mxu0
      %v469 = vadd.f32 0.0, %v468
      %v470 = vpop.f32.mrf.mxu0
      %v471 = vadd.f32 0.0, %v470
      %472 = vmatprep.mubr.bf16.mxu0 0
      %473 = vmatmul.mubr.bf16.gmra.mxu0 %v309
      %v474 = vpop.f32.mrf.mxu0
      %v475 = vadd.f32 0.0, %v474
      %v476 = vpop.f32.mrf.mxu0
      %v477 = vadd.f32 0.0, %v476
      %v478 = vpop.f32.mrf.mxu0
      %v479 = vadd.f32 0.0, %v478
      %v480 = vpop.f32.mrf.mxu0
      %v481 = vadd.f32 0.0, %v480
      %482 = vmatprep.mubr.bf16.mxu0 0
      %483 = vmatmul.mubr.bf16.gmra.mxu0 %v312
      %v484 = vpop.f32.mrf.mxu0
      %v485 = vadd.f32 0.0, %v484
      %v486 = vpop.f32.mrf.mxu0
      %v487 = vadd.f32 0.0, %v486
      %v488 = vpop.f32.mrf.mxu0
      %v489 = vadd.f32 0.0, %v488
      %v490 = vpop.f32.mrf.mxu0
      %v491 = vadd.f32 0.0, %v490
      %492 = vmatprep.mubr.bf16.mxu0 0
      %493 = vmatmul.mubr.bf16.gmra.mxu0 %v315
      %v494 = vpop.f32.mrf.mxu0
      %v495 = vadd.f32 0.0, %v494
      %v496 = vpop.f32.mrf.mxu0
      %v497 = vadd.f32 0.0, %v496
      %v498 = vpop.f32.mrf.mxu0
      %v499 = vadd.f32 0.0, %v498
      %v500 = vpop.f32.mrf.mxu0
      %v501 = vadd.f32 0.0, %v500
      %502 = vmatprep.mubr.bf16.mxu0 0
      %503 = vmatmul.mubr.bf16.gmra.mxu0 %v318
      %v504 = vpop.f32.mrf.mxu0
      %v505 = vadd.f32 0.0, %v504
      %v506 = vpop.f32.mrf.mxu0
      %v507 = vadd.f32 0.0, %v506
      %v508 = vpop.f32.mrf.mxu0
      %v509 = vadd.f32 0.0, %v508
      %v510 = vpop.f32.mrf.mxu0
      %v511 = vadd.f32 0.0, %v510
      %512 = vdwg.mxu0
      %v513 = vadd.f32 %v355, %v359
      %v514 = vadd.f32 %v513, %v365
      %v515 = vadd.f32 %v514, %v369
      %v516 = vadd.f32 %v515, %v375
      %v517 = vadd.f32 %v516, %v379
      %v518 = vadd.f32 %v517, %v385
      %v519 = vadd.f32 %v518, %v389
      %v520 = vadd.f32 %v519, %v395
      %v521 = vadd.f32 %v520, %v399
      %v522 = vadd.f32 %v521, %v405
      %v523 = vadd.f32 %v522, %v409
      %v524 = vadd.f32 %v523, %v415
      %v525 = vadd.f32 %v524, %v419
      %v526 = vadd.f32 %v525, %v425
      %v527 = vadd.f32 %v526, %v429
      %v528 = vadd.f32 %v527, %v435
      %v529 = vadd.f32 %v528, %v439
      %v530 = vadd.f32 %v529, %v445
      %v531 = vadd.f32 %v530, %v449
      %v532 = vadd.f32 %v531, %v455
      %v533 = vadd.f32 %v532, %v459
      %v534 = vadd.f32 %v533, %v465
      %v535 = vadd.f32 %v534, %v469
      %v536 = vadd.f32 %v535, %v475
      %v537 = vadd.f32 %v536, %v479
      %v538 = vadd.f32 %v537, %v485
      %v539 = vadd.f32 %v538, %v489
      %v540 = vadd.f32 %v539, %v495
      %v541 = vadd.f32 %v540, %v499
      %v542 = vadd.f32 %v541, %v505
      %v543 = vadd.f32 %v542, %v509
      %v544 = vrot.slane %v543, 4
      %v545 = vadd.f32 %v543, %v544
      %v546 = vrot.slane %v545, 2
      %v547 = vadd.f32 %v545, %v546
      %v548 = vrot.slane %v547, 1
      %v549 = vadd.f32 %v547, %v548
      %v550 = vadd.f32 %v357, %v361
      %v551 = vadd.f32 %v550, %v367
      %v552 = vadd.f32 %v551, %v371
      %v553 = vadd.f32 %v552, %v377
      %v554 = vadd.f32 %v553, %v381
      %v555 = vadd.f32 %v554, %v387
      %v556 = vadd.f32 %v555, %v391
      %v557 = vadd.f32 %v556, %v397
      %v558 = vadd.f32 %v557, %v401
      %v559 = vadd.f32 %v558, %v407
      %v560 = vadd.f32 %v559, %v411
      %v561 = vadd.f32 %v560, %v417
      %v562 = vadd.f32 %v561, %v421
      %v563 = vadd.f32 %v562, %v427
      %v564 = vadd.f32 %v563, %v431
      %v565 = vadd.f32 %v564, %v437
      %v566 = vadd.f32 %v565, %v441
      %v567 = vadd.f32 %v566, %v447
      %v568 = vadd.f32 %v567, %v451
      %v569 = vadd.f32 %v568, %v457
      %v570 = vadd.f32 %v569, %v461
      %v571 = vadd.f32 %v570, %v467
      %v572 = vadd.f32 %v571, %v471
      %v573 = vadd.f32 %v572, %v477
      %v574 = vadd.f32 %v573, %v481
      %v575 = vadd.f32 %v574, %v487
      %v576 = vadd.f32 %v575, %v491
      %v577 = vadd.f32 %v576, %v497
      %v578 = vadd.f32 %v577, %v501
      %v579 = vadd.f32 %v578, %v507
      %v580 = vadd.f32 %v579, %v511
      %v581 = vrot.slane %v580, 4
      %v582 = vadd.f32 %v580, %v581
      %v583 = vrot.slane %v582, 2
      %v584 = vadd.f32 %v582, %v583
      %v585 = vrot.slane %v584, 1
      %v586 = vadd.f32 %v584, %v585
      %v587 = vmul.f32 %v355, %v355
      %v588 = vmul.f32 %v357, %v357
      %v589 = vmul.f32 %v359, %v359
      %v590 = vmul.f32 %v361, %v361
      %v591 = vmul.f32 %v365, %v365
      %v592 = vmul.f32 %v367, %v367
      %v593 = vmul.f32 %v369, %v369
      %v594 = vmul.f32 %v371, %v371
      %v595 = vmul.f32 %v375, %v375
      %v596 = vmul.f32 %v377, %v377
      %v597 = vmul.f32 %v379, %v379
      %v598 = vmul.f32 %v381, %v381
      %v599 = vmul.f32 %v385, %v385
      %v600 = vmul.f32 %v387, %v387
      %v601 = vmul.f32 %v389, %v389
      %v602 = vmul.f32 %v391, %v391
      %v603 = vmul.f32 %v395, %v395
      %v604 = vmul.f32 %v397, %v397
      %v605 = vmul.f32 %v399, %v399
      %v606 = vmul.f32 %v401, %v401
      %v607 = vmul.f32 %v405, %v405
      %v608 = vmul.f32 %v407, %v407
      %v609 = vmul.f32 %v409, %v409
      %v610 = vmul.f32 %v411, %v411
      %v611 = vmul.f32 %v415, %v415
      %v612 = vmul.f32 %v417, %v417
      %v613 = vmul.f32 %v419, %v419
      %v614 = vmul.f32 %v421, %v421
      %v615 = vmul.f32 %v425, %v425
      %v616 = vmul.f32 %v427, %v427
      %v617 = vmul.f32 %v429, %v429
      %v618 = vmul.f32 %v431, %v431
      %v619 = vmul.f32 %v435, %v435
      %v620 = vmul.f32 %v437, %v437
      %v621 = vmul.f32 %v439, %v439
      %v622 = vmul.f32 %v441, %v441
      %v623 = vmul.f32 %v445, %v445
      %v624 = vmul.f32 %v447, %v447
      %v625 = vmul.f32 %v449, %v449
      %v626 = vmul.f32 %v451, %v451
      %v627 = vmul.f32 %v455, %v455
      %v628 = vmul.f32 %v457, %v457
      %v629 = vmul.f32 %v459, %v459
      %v630 = vmul.f32 %v461, %v461
      %v631 = vmul.f32 %v465, %v465
      %v632 = vmul.f32 %v467, %v467
      %v633 = vmul.f32 %v469, %v469
      %v634 = vmul.f32 %v471, %v471
      %v635 = vmul.f32 %v475, %v475
      %v636 = vmul.f32 %v477, %v477
      %v637 = vmul.f32 %v479, %v479
      %v638 = vmul.f32 %v481, %v481
      %v639 = vmul.f32 %v485, %v485
      %v640 = vmul.f32 %v487, %v487
      %v641 = vmul.f32 %v489, %v489
      %v642 = vmul.f32 %v491, %v491
      %v643 = vmul.f32 %v495, %v495
      %v644 = vmul.f32 %v497, %v497
      %v645 = vmul.f32 %v499, %v499
      %v646 = vmul.f32 %v501, %v501
      %v647 = vmul.f32 %v505, %v505
      %v648 = vmul.f32 %v507, %v507
      %v649 = vmul.f32 %v509, %v509
      %v650 = vmul.f32 %v511, %v511
      %v651 = vadd.f32 %v587, %v589
      %v652 = vadd.f32 %v651, %v591
      %v653 = vadd.f32 %v652, %v593
      %v654 = vadd.f32 %v653, %v595
      %v655 = vadd.f32 %v654, %v597
      %v656 = vadd.f32 %v655, %v599
      %v657 = vadd.f32 %v656, %v601
      %v658 = vadd.f32 %v657, %v603
      %v659 = vadd.f32 %v658, %v605
      %v660 = vadd.f32 %v659, %v607
      %v661 = vadd.f32 %v660, %v609
      %v662 = vadd.f32 %v661, %v611
      %v663 = vadd.f32 %v662, %v613
      %v664 = vadd.f32 %v663, %v615
      %v665 = vadd.f32 %v664, %v617
      %v666 = vadd.f32 %v665, %v619
      %v667 = vadd.f32 %v666, %v621
      %v668 = vadd.f32 %v667, %v623
      %v669 = vadd.f32 %v668, %v625
      %v670 = vadd.f32 %v669, %v627
      %v671 = vadd.f32 %v670, %v629
      %v672 = vadd.f32 %v671, %v631
      %v673 = vadd.f32 %v672, %v633
      %v674 = vadd.f32 %v673, %v635
      %v675 = vadd.f32 %v674, %v637
      %v676 = vadd.f32 %v675, %v639
      %v677 = vadd.f32 %v676, %v641
      %v678 = vadd.f32 %v677, %v643
      %v679 = vadd.f32 %v678, %v645
      %v680 = vadd.f32 %v679, %v647
      %v681 = vadd.f32 %v680, %v649
      %v682 = vrot.slane %v681, 4
      %v683 = vadd.f32 %v681, %v682
      %v684 = vrot.slane %v683, 2
      %v685 = vadd.f32 %v683, %v684
      %v686 = vrot.slane %v685, 1
      %v687 = vadd.f32 %v685, %v686
      %v688 = vadd.f32 %v588, %v590
      %v689 = vadd.f32 %v688, %v592
      %v690 = vadd.f32 %v689, %v594
      %v691 = vadd.f32 %v690, %v596
      %v692 = vadd.f32 %v691, %v598
      %v693 = vadd.f32 %v692, %v600
      %v694 = vadd.f32 %v693, %v602
      %v695 = vadd.f32 %v694, %v604
      %v696 = vadd.f32 %v695, %v606
      %v697 = vadd.f32 %v696, %v608
      %v698 = vadd.f32 %v697, %v610
      %v699 = vadd.f32 %v698, %v612
      %v700 = vadd.f32 %v699, %v614
      %v701 = vadd.f32 %v700, %v616
      %v702 = vadd.f32 %v701, %v618
      %v703 = vadd.f32 %v702, %v620
      %v704 = vadd.f32 %v703, %v622
      %v705 = vadd.f32 %v704, %v624
      %v706 = vadd.f32 %v705, %v626
      %v707 = vadd.f32 %v706, %v628
      %v708 = vadd.f32 %v707, %v630
      %v709 = vadd.f32 %v708, %v632
      %v710 = vadd.f32 %v709, %v634
      %v711 = vadd.f32 %v710, %v636
      %v712 = vadd.f32 %v711, %v638
      %v713 = vadd.f32 %v712, %v640
      %v714 = vadd.f32 %v713, %v642
      %v715 = vadd.f32 %v714, %v644
      %v716 = vadd.f32 %v715, %v646
      %v717 = vadd.f32 %v716, %v648
      %v718 = vadd.f32 %v717, %v650
      %v719 = vrot.slane %v718, 4
      %v720 = vadd.f32 %v718, %v719
      %v721 = vrot.slane %v720, 2
      %v722 = vadd.f32 %v720, %v721
      %v723 = vrot.slane %v722, 1
      %v724 = vadd.f32 %v722, %v723
      %vm725 = vcmask 1040384
      %v726 = vsel %vm725, %v549, %v687
      %v727 = vsel %vm725, %v586, %v724
      %v730 = vcombine.low %v726, %v727
      %v732 = vunpack.c.l.s4 1983009808
      %v733 = vunpack.c.0.s8 %v732
      %v734 = vlaneseq
      %v735 = vshrl.u32 %v734, 7
      %v736 = vsub.s32 %v733, %v735
      %v737 = vrot.slane %v730, %v736
      %739 = vst [vmem:[%s145] sm:$0xf] %v737
      %p740 = scmp.lt.s32.totalorder %s13, 1
      %s741 = scalar_select %p740, %s13, 1
      %s742 = smul.addr %s741, 2
      %s743 = smul.addr %s742, 2
      %s744 = scalar_lea.vmem %s2, %s743
      // Predicated region
      $region29: #{upsampling_forward.2} parent=27 // pred_check
        %p745 = pneg %p78
      $region30: #{upsampling_forward.2} parent=27 // pred_check_branch
        %747 = sbr.rel (%p745) target = $region32
      $region31: #{upsampling_forward.2} parent=27 // pred_region
        _
      $region32: #{upsampling_forward.2} parent=27 // pred_fallthru
        _
    $region28: #{upsampling_forward.2} parent=5 // pred_fallthru
      _
    %p748 = scmp.le.s32.totalorder 2, %s8
    // Predicated region
    $region33: #{upsampling_forward.2} parent=5 // pred_check
      %p749 = pneg %p748
    $region34: #{upsampling_forward.2} parent=5 // pred_check_branch
      %751 = sbr.rel (%p749) target = $region36
    $region35: #{upsampling_forward.2} parent=5 // pred_region
      %s752 = ssub.s32 %s8, 2
      // Predicated region
      $region37: #{upsampling_forward.2} parent=35 // pred_check
        %p753 = pneg %p84
      $region38: #{upsampling_forward.2} parent=35 // pred_check_branch
        %755 = sbr.rel (%p753) target = $region40
      $region39: #{upsampling_forward.2} parent=35 // pred_region
        %p756 = scmp.lt.s32.totalorder %s14, 1
        %s757 = scalar_select %p756, %s14, 1
        %s758 = smul.addr %s757, 2
        %s759 = smul.addr %s758, 2
        %s760 = scalar_lea.vmem %s2, %s759
      $region40: #{upsampling_forward.2} parent=35 // pred_fallthru
        _
    $region36: #{upsampling_forward.2} parent=5 // pred_fallthru
      _
  $region6: #{upsampling_forward.2} parent=0 // loop_footer
    %s12 = sadd.s32 1, %s8
  $region7: #{upsampling_forward.2} parent=0 // loop_footer_branch
    %7 = sbr.rel target = $region3
  $region8: #{upsampling_forward.2} parent=0 // loop_exit
    _

</llo_original>
